<compile_context>
chip_gen: v6e
topology: v6e:2x2x1
jax: 0.10.0
libtpu: 0.0.40
codegen_flags: <defaults>
</compile_context>

<pallas_src>
import jax
import jax.numpy as jnp
from jax.experimental import pallas as pl
from jax.experimental.pallas import tpu as pltpu


def _decode_kernel(pred_ref, off_ref, scale_ref, out_ref):
    """Decode one (A, attrs, tile_hw) slab of one batch element.

    pred_ref : VMEM (A, attrs, T) native dtype -- raw head output, HW lane-dense.
    off_ref  : VMEM (slab, T) f32  -- row 0 = grid_x, row 1 = grid_y, rest 0.
                                      slab = min(8, attrs).
    scale_ref: VMEM (A, slab, 1) f32 -- [stride_w, stride_h, aw, ah, 1, ...].
    out_ref  : VMEM (A, attrs, T)  -- rows: bx, by, bw, bh, conf, cls...
    """
    attrs = out_ref.shape[1]
    slab = off_ref.shape[0]          # static: min(8, attrs); rows 0..3 live here

    # Head slab: cast to f32 (required before exp/sigmoid on v5e), whole-slab
    # sigmoid/exp with a sublane row-select (rows 2,3 -> exp).  The wasted
    # exp on <=6 non-wh rows rides the otherwise idle EUP slot.
    p_head = pred_ref[:, :slab, :].astype(jnp.float32)        # (A, slab, T)
    row = jax.lax.broadcasted_iota(jnp.int32, p_head.shape, dimension=1)
    is_wh = jnp.logical_and(row >= 2, row < 4)
    base = jnp.where(is_wh, jnp.exp(p_head), jax.nn.sigmoid(p_head))
    # per row: 0:(sig+gx)*stride_w  1:(sig+gy)*stride_h  2:exp*aw  3:exp*ah
    #          4..slab-1: sigmoid * 1 (+0)
    head = (base + off_ref[...][None]) * scale_ref[...]
    out_ref[:, :slab, :] = head.astype(out_ref.dtype)

    if attrs > slab:
        # Remaining class rows: plain sigmoid, no offset, no scale.
        tail = pred_ref[:, slab:, :].astype(jnp.float32)
        out_ref[:, slab:, :] = jax.nn.sigmoid(tail).astype(out_ref.dtype)


def _round_up(x, m):
    return (x + m - 1) // m * m


def _pick_tile_hw(hw, batch, max_tile=2048):
    """Largest multiple-of-128 divisor of the 128-padded HW that is <= cap.

    For batch < 2 the cap is halved-ish so the grid has >=2 blocks (keeps both
    v7x TensorCores busy); padding never exceeds the 128-lane alignment slack.
    """
    hw128 = _round_up(hw, 128)
    cap = max_tile
    if batch < 2 and hw128 >= 256:
        cap = min(cap, hw128 // 2)
    units = hw128 // 128
    best = 128
    for d in range(1, units + 1):
        t = d * 128
        if units % d == 0 and t <= cap:
            best = t
    return best, hw128


def decode_box(inp, anchors, num_classes, img_size, *,
               out_dtype=jnp.float32, raw_layout=False, max_tile_hw=2048):
    """JAX/Pallas equivalent of DecodeBox.forward.

    inp: (B, A*(5+C), H, W), any float dtype (bf16 recommended for the head).
    returns: (B, A*H*W, 5+C) in out_dtype, or the fuse-friendly
             (B, A, 5+C, H*W) slab when raw_layout=True.
    """
    anchors = [(float(aw), float(ah)) for aw, ah in anchors]
    A = len(anchors)
    attrs = 5 + num_classes
    B, Cin, H, W = inp.shape
    assert Cin == A * attrs, (Cin, A, attrs)
    HW = H * W

    stride_h = float(img_size[1]) / H
    stride_w = float(img_size[0]) / W

    # (B, A*(5+C), H, W) -> (B, A, attrs, HW): pure reshape, same memory order,
    # NATIVE dtype (no wrapper-side f32 cast -> no extra HBM pass).
    pred = inp.reshape(B, A, attrs, HW)

    tile_hw, HW_pad = _pick_tile_hw(HW, B, max_tile_hw)
    n_tiles = HW_pad // tile_hw
    if HW_pad != HW:
        pred = jnp.pad(pred, ((0, 0), (0, 0), (0, 0), (0, HW_pad - HW)))

    # Grid offsets, hoisted out of the kernel.  Only rows 0..1 are nonzero, so
    # keep just a min(8, attrs)-row, sublane-aligned slab.
    slab = min(8, attrs)
    gx = jnp.tile(jnp.arange(W, dtype=jnp.float32), H)           # (HW,)
    gy = jnp.repeat(jnp.arange(H, dtype=jnp.float32), W)         # (HW,)
    offset = jnp.zeros((slab, HW_pad), jnp.float32)
    offset = offset.at[0, :HW].set(gx).at[1, :HW].set(gy)

    # Per-(anchor, head-row) multiplier.  exp(tw)*(aw/stride_w)*stride_w
    # == exp(tw)*aw, so raw anchors are used directly.
    anchors_arr = jnp.asarray(anchors, dtype=jnp.float32)        # (A, 2)
    scale = jnp.concatenate(
        [jnp.full((A, 1), stride_w, jnp.float32),
         jnp.full((A, 1), stride_h, jnp.float32),
         anchors_arr,
         jnp.ones((A, slab - 4), jnp.float32)],
        axis=1)[:, :, None]                                      # (A, slab, 1)

    out = pl.pallas_call(
        _decode_kernel,
        out_shape=jax.ShapeDtypeStruct((B, A, attrs, HW_pad), out_dtype),
        grid_spec=pltpu.PrefetchScalarGridSpec(
            num_scalar_prefetch=0,
            grid=(B, n_tiles),
            in_specs=[
                pl.BlockSpec((None, A, attrs, tile_hw),
                             lambda b, t: (b, 0, 0, t)),
                pl.BlockSpec((slab, tile_hw), lambda b, t: (0, t)),
                pl.BlockSpec((A, slab, 1), lambda b, t: (0, 0, 0)),
            ],
            out_specs=pl.BlockSpec((None, A, attrs, tile_hw),
                                   lambda b, t: (b, 0, 0, t)),
        ),
        # Per-buffer block = A*attrs*tile_hw*itemsize (<~2 MB even for COCO
        # attrs=85 at tile_hw=2048); double-buffered in+out stays far under the
        # v7x 32 MiB default scoped VMEM, so no vmem_limit_bytes override.
        compiler_params=pltpu.CompilerParams(
            dimension_semantics=("parallel", "parallel")),
    )(pred, offset, scale)

    if HW_pad != HW:
        out = out[..., :HW]
    if raw_layout:
        # Fuse-friendly layout for downstream consumers: no extra HBM pass.
        return out
    # Module contract: (B, A*H*W, 5+C) attrs-minor.  attrs << 128, so an
    # in-kernel transpose would force narrow masked stores; keep the permute
    # in XLA for tiny attrs (see TODOs above for large-attrs heads).
    return out.transpose(0, 1, 3, 2).reshape(B, A * HW, attrs)


def _reference_decode(inp, anchors, num_classes, img_size):
    """Pure-JAX replica of the PyTorch forward for verification (f32)."""
    A = len(anchors)
    attrs = 5 + num_classes
    B, _, H, W = inp.shape
    stride_h = img_size[1] / H
    stride_w = img_size[0] / W
    scaled = jnp.asarray([[aw / stride_w, ah / stride_h] for aw, ah in anchors],
                         dtype=jnp.float32)

    pred = inp.reshape(B, A, attrs, H, W).transpose(0, 1, 3, 4, 2)  # (B,A,H,W,attrs)
    x = jax.nn.sigmoid(pred[..., 0])
    y = jax.nn.sigmoid(pred[..., 1])
    w = pred[..., 2]
    h = pred[..., 3]
    conf = jax.nn.sigmoid(pred[..., 4])
    cls = jax.nn.sigmoid(pred[..., 5:])

    grid_x = jnp.broadcast_to(jnp.arange(W, dtype=jnp.float32)[None, :], (H, W))
    grid_y = jnp.broadcast_to(jnp.arange(H, dtype=jnp.float32)[:, None], (H, W))
    aw = scaled[:, 0][None, :, None, None]
    ah = scaled[:, 1][None, :, None, None]

    bx = (x + grid_x[None, None]) * stride_w
    by = (y + grid_y[None, None]) * stride_h
    bw = (jnp.exp(w) * aw) * stride_w
    bh = (jnp.exp(h) * ah) * stride_h

    boxes = jnp.stack([bx, by, bw, bh], axis=-1).reshape(B, -1, 4)
    return jnp.concatenate(
        [boxes, conf.reshape(B, -1, 1), cls.reshape(B, -1, num_classes)], axis=-1)


if __name__ == "__main__":
    key = jax.random.PRNGKey(0)

    # --- Test 1: small head, f32 input (module-consistent small shapes) -----
    anchors = [(10.0, 13.0), (16.0, 30.0), (33.0, 23.0)]   # 3 anchors
    num_classes = 2                                        # bbox_attrs = 7
    img_size = (64, 64)
    B, H, W = 2, 16, 16
    A, attrs = len(anchors), 5 + num_classes

    k1, k2 = jax.random.split(key)
    x = jax.random.normal(k1, (B, A * attrs, H, W), dtype=jnp.float32)

    out = jax.block_until_ready(decode_box(x, anchors, num_classes, img_size))
    ref = _reference_decode(x, anchors, num_classes, img_size)
    assert out.shape == (B, A * H * W, attrs), out.shape
    assert jnp.allclose(out, ref, atol=1e-4, rtol=1e-4), "mismatch vs reference (f32)"

    # --- Test 2: bf16 input, large attrs (tail branch), padded/tiled HW -----
    num_classes2 = 80                                      # bbox_attrs = 85
    img_size2 = (416, 416)
    B2, H2, W2 = 1, 13, 13
    attrs2 = 5 + num_classes2
    x2 = jax.random.normal(k2, (B2, A * attrs2, H2, W2), dtype=jnp.float32)
    x2_bf16 = x2.astype(jnp.bfloat16)

    out2 = jax.block_until_ready(
        decode_box(x2_bf16, anchors, num_classes2, img_size2))
    ref2 = _reference_decode(x2_bf16.astype(jnp.float32), anchors,
                             num_classes2, img_size2)
    assert out2.shape == (B2, A * H2 * W2, attrs2), out2.shape
    assert jnp.allclose(out2, ref2, atol=1e-2, rtol=1e-3), "mismatch vs reference (bf16)"

    print("KERNEL_OK")
</pallas_src>

<mosaic_0001>
module attributes {stable_mosaic.version = 11 : i64} {
  func.func @_decode_kernel(%arg0: i32, %arg1: i32, %arg2: memref<1x3x7x256xf32, #tpu.memory_space<vmem>>, %arg3: memref<7x256xf32, #tpu.memory_space<vmem>>, %arg4: memref<3x7x1xf32, #tpu.memory_space<vmem>>, %arg5: memref<1x3x7x256xf32, #tpu.memory_space<vmem>>) attributes {dimension_semantics = [#tpu.dimension_semantics<parallel>, #tpu.dimension_semantics<parallel>], iteration_bounds = array<i64: 2, 1>, scalar_prefetch = 0 : i64, scratch_operands = 0 : i64, tpu.core_type = #tpu.core_type<tc>, window_params = [{transform_indices = @transform_0, window_bounds = array<i64: 1, 3, 7, 256>}, {transform_indices = @transform_1, window_bounds = array<i64: 7, 256>}, {pipeline_mode = #tpu.pipeline_mode<synchronous>, transform_indices = @transform_2, window_bounds = array<i64: 3, 7, 1>}, {transform_indices = @transform_3, window_bounds = array<i64: 1, 3, 7, 256>}]} {
    %c0 = arith.constant 0 : index
    %c0_0 = arith.constant 0 : index
    %c0_1 = arith.constant 0 : index
    %c0_2 = arith.constant 0 : index
    %0 = vector.load %arg2[%c0, %c0_0, %c0_1, %c0_2] : memref<1x3x7x256xf32, #tpu.memory_space<vmem>>, vector<1x3x7x256xf32>
    %1 = vector.shape_cast %0 : vector<1x3x7x256xf32> to vector<3x7x256xf32>
    %2 = tpu.iota {dimensions = array<i32: 1>} : vector<3x7x256xi32>
    %c2_i32 = arith.constant 2 : i32
    %3 = vector.broadcast %c2_i32 : i32 to vector<3x7x256xi32>
    %4 = arith.cmpi sge, %2, %3 : vector<3x7x256xi32>
    %c4_i32 = arith.constant 4 : i32
    %5 = vector.broadcast %c4_i32 : i32 to vector<3x7x256xi32>
    %6 = arith.cmpi slt, %2, %5 : vector<3x7x256xi32>
    %7 = arith.andi %4, %6 : vector<3x7x256xi1>
    %8 = math.exp %1 : vector<3x7x256xf32>
    %9 = arith.negf %1 : vector<3x7x256xf32>
    %10 = math.exp %9 : vector<3x7x256xf32>
    %cst = arith.constant 1.000000e+00 : f32
    %11 = vector.broadcast %cst : f32 to vector<3x7x256xf32>
    %12 = arith.addf %11, %10 : vector<3x7x256xf32>
    %13 = arith.divf %11, %12 : vector<3x7x256xf32>
    %14 = arith.select %7, %8, %13 : vector<3x7x256xi1>, vector<3x7x256xf32>
    %c0_3 = arith.constant 0 : index
    %c0_4 = arith.constant 0 : index
    %15 = vector.load %arg3[%c0_3, %c0_4] : memref<7x256xf32, #tpu.memory_space<vmem>>, vector<7x256xf32>
    %16 = vector.shape_cast %15 : vector<7x256xf32> to vector<1x7x256xf32>
    %17 = vector.broadcast %16 : vector<1x7x256xf32> to vector<3x7x256xf32>
    %18 = arith.addf %14, %17 : vector<3x7x256xf32>
    %c0_5 = arith.constant 0 : index
    %c0_6 = arith.constant 0 : index
    %c0_7 = arith.constant 0 : index
    %19 = vector.load %arg4[%c0_5, %c0_6, %c0_7] : memref<3x7x1xf32, #tpu.memory_space<vmem>>, vector<3x7x1xf32>
    %20 = vector.broadcast %19 : vector<3x7x1xf32> to vector<3x7x256xf32>
    %21 = arith.mulf %18, %20 : vector<3x7x256xf32>
    %c0_8 = arith.constant 0 : index
    %c0_9 = arith.constant 0 : index
    %c0_10 = arith.constant 0 : index
    %c0_11 = arith.constant 0 : index
    %22 = vector.load %arg5[%c0_8, %c0_9, %c0_10, %c0_11] : memref<1x3x7x256xf32, #tpu.memory_space<vmem>>, vector<1x3x7x256xf32>
    %23 = vector.shape_cast %22 : vector<1x3x7x256xf32> to vector<3x7x256xf32>
    %24 = vector.shape_cast %21 : vector<3x7x256xf32> to vector<1x3x7x256xf32>
    tpu.vector_store %arg5[%c0_8, %c0_9, %c0_10, %c0_11], %24 {strides = array<i32>} : memref<1x3x7x256xf32, #tpu.memory_space<vmem>>, vector<1x3x7x256xf32>,
    return
  }
  func.func @transform_0(%arg0: i32, %arg1: i32) -> (i32, i32, i32, i32) {
    %c0_i32 = arith.constant 0 : i32
    %c0_i32_0 = arith.constant 0 : i32
    %c0_i32_1 = arith.constant 0 : i32
    return %arg0, %c0_i32, %c0_i32_0, %arg1 : i32, i32, i32, i32
  }
  func.func @transform_1(%arg0: i32, %arg1: i32) -> (i32, i32) {
    %c0_i32 = arith.constant 0 : i32
    %c0_i32_0 = arith.constant 0 : i32
    return %c0_i32, %arg1 : i32, i32
  }
  func.func @transform_2(%arg0: i32, %arg1: i32) -> (i32, i32, i32) {
    %c0_i32 = arith.constant 0 : i32
    %c0_i32_0 = arith.constant 0 : i32
    %c0_i32_1 = arith.constant 0 : i32
    %c0_i32_2 = arith.constant 0 : i32
    return %c0_i32, %c0_i32_0, %c0_i32_1 : i32, i32, i32
  }
  func.func @transform_3(%arg0: i32, %arg1: i32) -> (i32, i32, i32, i32) {
    %c0_i32 = arith.constant 0 : i32
    %c0_i32_0 = arith.constant 0 : i32
    %c0_i32_1 = arith.constant 0 : i32
    return %arg0, %c0_i32, %c0_i32_0, %arg1 : i32, i32, i32, i32
  }
}

</mosaic_0001>

<llo_original>
// kernel: tpu_custom_call.1
$region0: #{tpu_custom_call.1}
  #allocation0 [shape = 'u32[]', space=smem, size = 0x4, offset = 0x4, fixed_abs, tag = 'smem constant byte address 0x4 - core index']
  #allocation1 [shape = 'u32[144,128]{1,0:T(1,128)}', space=vmem, size = 0x12000, scoped, tag = 'internal scratch']
  %s0 = inlined_call_operand.vmem [shape: f32[2,3,7,256], index: 0, kind: input, shape index: {}]
  %s1 = inlined_call_operand.vmem [shape: f32[7,256], index: 1, kind: input, shape index: {}]
  %s2 = inlined_call_operand.vmem [shape: f32[3,7,1], index: 2, kind: input, shape index: {}]
  %s3 = inlined_call_operand.vmem [shape: f32[2,3,7,256], index: 3, kind: output, shape index: {}]
  %s4 = sld [smem:[#allocation0]]
  $region45: #{tpu_custom_call.1} parent=0
    _
  %s6 = ssub.s32 1, %s4
  %s7 = scalar_select 0, %s6, %s4
  loop: start=0, step=1, limit=4
  $region2: #{tpu_custom_call.1} parent=0 // loop_pre_header
    _
  $region3: #{tpu_custom_call.1} parent=0 // loop_header
    %s9 = sphi 0, %s13
    %p10 = scmp.ge.s32.totalorder %s9, 4
    %s16 = sphi 0, %s28
    %s17 = sphi 0, %s24
    %s18 = sphi 0, %s16
    %s19 = sphi 0, %s17
    %s20 = sphi 0, %s18
    %s21 = sphi 0, %s19
    %s33 = sphi 0, %s35
    %s36 = sphi 0, %s33
    %s37 = sphi 0, %s36
    %s53 = sphi 0, %s37
    %s59 = sphi 0, %s61
    %s62 = sphi 0, %s59
    %s63 = sphi 0, %s62
    %s79 = sphi 0, %s63
    %s83 = sphi 0, %s83
    %s85 = sphi 0, %s83
    %s86 = sphi 0, %s85
    %s100 = sphi 0, %s86
    %s108 = sphi 0, %s110
    %s111 = sphi 0, %s108
    %s112 = sphi 0, %s111
    %s128 = sphi 0, %s112
  $region4: #{tpu_custom_call.1} parent=0 // loop_header_branch
    %12 = sbr.rel (%p10) target = $region8
  $region5: #{tpu_custom_call.1} parent=0 // loop_body
    %s14 = ssub.s32 %s9, 1
    %s15 = ssub.s32 %s9, 2
    %s22 = sadd.s32 1, %s17
    %p23 = scmp.ge.s32.totalorder %s22, 1
    %s24 = scalar_select %p23, 0, %s22
    %s25 = sadd.s32 1, %s16
    %s26 = scalar_select %p23, %s25, %s16
    %p27 = scmp.ge.s32.totalorder %s26, 2
    %s28 = scalar_select %p27, 0, %s26
    %s29 = ssub.s32 %s16, %s28
    %s30 = ssub.s32 %s17, %s24
    %s31 = sor.u32 %s29, %s30
    %p32 = scmp.eq.s32.totalorder %s31, 0
    %s34 = sadd.s32 %s33, 1
    %s35 = scalar_select %p32, %s33, %s34
    %p38 = pneg %p32
    %p39 = scmp.eq.s32.totalorder %s9, 1
    %p40 = por %p38, %p39
    %p41 = scmp.ne.s32.totalorder %s33, %s36
    %p42 = scmp.eq.s32.totalorder %s9, 0
    %p43 = por %p41, %p42
    %p44 = scmp.ne.s32.totalorder %s33, %s36
    %p45 = scmp.eq.s32.totalorder %s14, 1
    %p46 = por %p44, %p45
    %p47 = scmp.ne.s32.totalorder %s36, %s37
    %p48 = scmp.eq.s32.totalorder %s14, 0
    %p49 = por %p47, %p48
    %p50 = scmp.ne.s32.totalorder %s36, %s37
    %p51 = scmp.eq.s32.totalorder %s15, 1
    %p52 = por %p50, %p51
    %p54 = scmp.ne.s32.totalorder %s37, %s53
    %p55 = scmp.eq.s32.totalorder %s15, 0
    %p56 = por %p54, %p55
    %s57 = ssub.s32 %s17, %s24
    %p58 = scmp.eq.s32.totalorder %s57, 0
    %s60 = sadd.s32 %s59, 1
    %s61 = scalar_select %p58, %s59, %s60
    %p64 = pneg %p58
    %p65 = scmp.eq.s32.totalorder %s9, 1
    %p66 = por %p64, %p65
    %p67 = scmp.ne.s32.totalorder %s59, %s62
    %p68 = scmp.eq.s32.totalorder %s9, 0
    %p69 = por %p67, %p68
    %p70 = scmp.ne.s32.totalorder %s59, %s62
    %p71 = scmp.eq.s32.totalorder %s14, 1
    %p72 = por %p70, %p71
    %p73 = scmp.ne.s32.totalorder %s62, %s63
    %p74 = scmp.eq.s32.totalorder %s14, 0
    %p75 = por %p73, %p74
    %p76 = scmp.ne.s32.totalorder %s62, %s63
    %p77 = scmp.eq.s32.totalorder %s15, 1
    %p78 = por %p76, %p77
    %p80 = scmp.ne.s32.totalorder %s63, %s79
    %p81 = scmp.eq.s32.totalorder %s15, 0
    %p82 = por %p80, %p81
    %s84 = sadd.s32 %s83, 1
    %p87 = scmp.eq.s32.totalorder %s9, 1
    %p88 = scmp.ne.s32.totalorder %s83, %s85
    %p89 = scmp.eq.s32.totalorder %s9, 0
    %p90 = por %p88, %p89
    %p91 = scmp.ne.s32.totalorder %s83, %s85
    %p92 = scmp.eq.s32.totalorder %s14, 1
    %p93 = por %p91, %p92
    %p94 = scmp.ne.s32.totalorder %s85, %s86
    %p95 = scmp.eq.s32.totalorder %s14, 0
    %p96 = por %p94, %p95
    %p97 = scmp.ne.s32.totalorder %s85, %s86
    %p98 = scmp.eq.s32.totalorder %s15, 1
    %p99 = por %p97, %p98
    %p101 = scmp.ne.s32.totalorder %s86, %s100
    %p102 = scmp.eq.s32.totalorder %s15, 0
    %p103 = por %p101, %p102
    %s104 = ssub.s32 %s16, %s28
    %s105 = ssub.s32 %s17, %s24
    %s106 = sor.u32 %s104, %s105
    %p107 = scmp.eq.s32.totalorder %s106, 0
    %s109 = sadd.s32 %s108, 1
    %s110 = scalar_select %p107, %s108, %s109
    %p113 = pneg %p107
    %p114 = scmp.eq.s32.totalorder %s9, 1
    %p115 = por %p113, %p114
    %p116 = scmp.ne.s32.totalorder %s108, %s111
    %p117 = scmp.eq.s32.totalorder %s9, 0
    %p118 = por %p116, %p117
    %p119 = scmp.ne.s32.totalorder %s108, %s111
    %p120 = scmp.eq.s32.totalorder %s14, 1
    %p121 = por %p119, %p120
    %p122 = scmp.ne.s32.totalorder %s111, %s112
    %p123 = scmp.eq.s32.totalorder %s14, 0
    %p124 = por %p122, %p123
    %p125 = scmp.ne.s32.totalorder %s111, %s112
    %p126 = scmp.eq.s32.totalorder %s15, 1
    %p127 = por %p125, %p126
    %p129 = scmp.ne.s32.totalorder %s112, %s128
    %p130 = scmp.eq.s32.totalorder %s15, 0
    %p131 = por %p129, %p130
    %p132 = scmp.le.s32.totalorder 1, %s9
    %p133 = scmp.lt.s32.totalorder %s9, 3
    %p134 = pnand %p132, %p133
    %p135 = pneg %p134
    // Predicated region
    $region9: #{tpu_custom_call.1} parent=5 // pred_check
      _
    $region10: #{tpu_custom_call.1} parent=5 // pred_check_branch
      %137 = sbr.rel (%p134) target = $region12
    $region11: #{tpu_custom_call.1} parent=5 // pred_region
      %s138 = ssub.s32 %s9, 1
      // Predicated region
      $region13: #{tpu_custom_call.1} parent=11 // pred_check
        %p139 = pneg %p75
      $region14: #{tpu_custom_call.1} parent=11 // pred_check_branch
        %141 = sbr.rel (%p139) target = $region16
      $region15: #{tpu_custom_call.1} parent=11 // pred_region
        %s142 = smul.u32 2, %s19
        %p143 = scmp.lt.s32.totalorder %s142, 1
        %s144 = scalar_select %p143, %s142, 1
        %s145 = smul.addr %s144, 8
        %s146 = scalar_lea.vmem %s1, %s145
        %s147 = smul.u32 2, %s19
      $region16: #{tpu_custom_call.1} parent=11 // pred_fallthru
        _
      // Predicated region
      $region17: #{tpu_custom_call.1} parent=11 // pred_check
        %p148 = pneg %p96
      $region18: #{tpu_custom_call.1} parent=11 // pred_check_branch
        %150 = sbr.rel (%p148) target = $region20
      $region19: #{tpu_custom_call.1} parent=11 // pred_region
        _
      $region20: #{tpu_custom_call.1} parent=11 // pred_fallthru
        _
    $region12: #{tpu_custom_call.1} parent=5 // pred_fallthru
      _
    %p151 = scmp.lt.s32.totalorder %s9, 2
    // Predicated region
    $region21: #{tpu_custom_call.1} parent=5 // pred_check
      %p152 = pneg %p151
    $region22: #{tpu_custom_call.1} parent=5 // pred_check_branch
      %154 = sbr.rel (%p152) target = $region24
    $region23: #{tpu_custom_call.1} parent=5 // pred_region
      // Predicated region
      $region25: #{tpu_custom_call.1} parent=23 // pred_check
        %p155 = pneg %p43
      $region26: #{tpu_custom_call.1} parent=23 // pred_check_branch
        %157 = sbr.rel (%p155) target = $region28
      $region27: #{tpu_custom_call.1} parent=23 // pred_region
        %s158 = smul.u32 2, %s17
        %p159 = scmp.lt.s32.totalorder %s16, 1
        %s160 = scalar_select %p159, %s16, 1
        %p161 = scmp.lt.s32.totalorder %s158, 1
        %s162 = scalar_select %p161, %s158, 1
        %s163 = smul.addr %s160, 6
        %s164 = sadd.s32 %s162, %s163
        %s165 = smul.addr %s164, 8
        %s166 = scalar_lea.vmem %s0, %s165
        %s167 = smul.u32 2, %s17
      $region28: #{tpu_custom_call.1} parent=23 // pred_fallthru
        _
    $region24: #{tpu_custom_call.1} parent=5 // pred_fallthru
      _
    %p168 = scmp.le.s32.totalorder 1, %s9
    %p169 = scmp.lt.s32.totalorder %s9, 3
    %p170 = pnand %p168, %p169
    %p171 = pneg %p170
    // Predicated region
    $region29: #{tpu_custom_call.1} parent=5 // pred_check
      _
    $region30: #{tpu_custom_call.1} parent=5 // pred_check_branch
      %173 = sbr.rel (%p170) target = $region32
    $region31: #{tpu_custom_call.1} parent=5 // pred_region
      %s174 = ssub.s32 %s9, 1
      %s175 = smul.u32 2, %s19
      %p176 = scmp.lt.s32.totalorder %s18, 1
      %s177 = scalar_select %p176, %s18, 1
      %p178 = scmp.lt.s32.totalorder %s175, 1
      %s179 = scalar_select %p178, %s175, 1
      %s180 = smul.addr %s177, 6
      %s181 = sadd.s32 %s179, %s180
      %s182 = smul.addr %s181, 8
      %s183 = scalar_lea.vmem %s0, %s182
      %p184 = pneg %p49
      %p185 = pneg %p46
      %s186 = smul.u32 2, %s19
      %p187 = scmp.lt.s32.totalorder %s186, 1
      %s188 = scalar_select %p187, %s186, 1
      %s189 = smul.addr %s188, 8
      %s190 = scalar_lea.vmem %s1, %s189
      %p191 = pneg %p75
      %p192 = pneg %p72
      %p193 = pneg %p96
      %p194 = pneg %p93
      %p195 = pneg %p124
      %p196 = pneg %p121
      %s197 = smul.u32 2, %s19
      %p198 = scmp.lt.s32.totalorder %s18, 1
      %s199 = scalar_select %p198, %s18, 1
      %p200 = scmp.lt.s32.totalorder %s197, 1
      %s201 = scalar_select %p200, %s197, 1
      %s202 = smul.addr %s199, 6
      %s203 = sadd.s32 %s201, %s202
      %s204 = smul.addr %s203, 8
      %s205 = scalar_lea.vmem %s3, %s204
      %s206 = smul.u32 2, %s19
      %p207 = scmp.lt.s32.totalorder %s18, 1
      %s208 = scalar_select %p207, %s18, 1
      %p209 = scmp.lt.s32.totalorder %s206, 1
      %s210 = scalar_select %p209, %s206, 1
      %s211 = smul.addr %s208, 6
      %s212 = sadd.s32 %s210, %s211
      %s213 = smul.addr %s212, 8
      %s214 = scalar_lea.vmem %s0, %s213
      %s215 = smul.u32 2, %s19
      %s216 = smul.u32 2, %s19
      %p217 = scmp.lt.s32.totalorder %s216, 1
      %s218 = scalar_select %p217, %s216, 1
      %s219 = smul.addr %s218, 8
      %s220 = scalar_lea.vmem %s1, %s219
      %s221 = smul.u32 2, %s19
      %s222 = smul.u32 2, %s19
      %p223 = scmp.lt.s32.totalorder %s18, 1
      %s224 = scalar_select %p223, %s18, 1
      %p225 = scmp.lt.s32.totalorder %s222, 1
      %s226 = scalar_select %p225, %s222, 1
      %s227 = smul.addr %s224, 6
      %s228 = sadd.s32 %s226, %s227
      %s229 = smul.addr %s228, 8
      %s230 = scalar_lea.vmem %s3, %s229
      %s231 = smul.u32 2, %s19
      %v232 = vld [vmem:[%s214] sm:$0x7f]
      %v233 = vld [vmem:[%s214 + $0x8] sm:$0x7f]
      %v234 = vld [vmem:[%s214 + $0x10] sm:$0x7f]
      %v235 = vld [vmem:[%s214 + $0x18] sm:$0x7f]
      %v236 = vld [vmem:[%s214 + $0x20] sm:$0x7f]
      %v237 = vld [vmem:[%s214 + $0x28] sm:$0x7f]
      %v238 = vlaneseq
      %v239 = vshrl.u32 %v238, 7
      %vm240 = vcmp.ge.s32.totalorder %v239, 2
      %vm241 = vcmp.lt.s32.totalorder %v239, 4
      %vm242 = vmand %vm240, %vm241
      %v243 = vmul.f32 %v232, 1.442695
      %v244 = vpow.pop %v243
      %v245 = vmul.f32 %v233, 1.442695
      %v246 = vpow.pop %v245
      %v247 = vmul.f32 %v234, 1.442695
      %v248 = vpow.pop %v247
      %v249 = vmul.f32 %v235, 1.442695
      %v250 = vpow.pop %v249
      %v251 = vmul.f32 %v236, 1.442695
      %v252 = vpow.pop %v251
      %v253 = vmul.f32 %v237, 1.442695
      %v254 = vpow.pop %v253
      %v255 = vxor.u32 %v232, 2147483648
      %v256 = vxor.u32 %v233, 2147483648
      %v257 = vxor.u32 %v234, 2147483648
      %v258 = vxor.u32 %v235, 2147483648
      %v259 = vxor.u32 %v236, 2147483648
      %v260 = vxor.u32 %v237, 2147483648
      %v261 = vmul.f32 %v255, 1.442695
      %v262 = vpow.pop %v261
      %v263 = vmul.f32 %v256, 1.442695
      %v264 = vpow.pop %v263
      %v265 = vmul.f32 %v257, 1.442695
      %v266 = vpow.pop %v265
      %v267 = vmul.f32 %v258, 1.442695
      %v268 = vpow.pop %v267
      %v269 = vmul.f32 %v259, 1.442695
      %v270 = vpow.pop %v269
      %v271 = vmul.f32 %v260, 1.442695
      %v272 = vpow.pop %v271
      %v273 = vadd.f32 %v262, 1.0
      %v274 = vadd.f32 %v264, 1.0
      %v275 = vadd.f32 %v266, 1.0
      %v276 = vadd.f32 %v268, 1.0
      %v277 = vadd.f32 %v270, 1.0
      %v278 = vadd.f32 %v272, 1.0
      %v279 = vrcp.pop %v273
      %v280 = vmul.f32 1.0, %v279
      %v281 = vrcp.pop %v274
      %v282 = vmul.f32 1.0, %v281
      %v283 = vrcp.pop %v275
      %v284 = vmul.f32 1.0, %v283
      %v285 = vrcp.pop %v276
      %v286 = vmul.f32 1.0, %v285
      %v287 = vrcp.pop %v277
      %v288 = vmul.f32 1.0, %v287
      %v289 = vrcp.pop %v278
      %v290 = vmul.f32 1.0, %v289
      %v291 = vsel %vm242, %v244, %v280
      %v292 = vsel %vm242, %v246, %v282
      %v293 = vsel %vm242, %v248, %v284
      %v294 = vsel %vm242, %v250, %v286
      %v295 = vsel %vm242, %v252, %v288
      %v296 = vsel %vm242, %v254, %v290
      %v297 = vld [vmem:[%s220] sm:$0x7f]
      %v298 = vld [vmem:[%s220 + $0x8] sm:$0x7f]
      %v299 = vadd.f32 %v291, %v297
      %v300 = vadd.f32 %v292, %v298
      %v301 = vadd.f32 %v293, %v297
      %v302 = vadd.f32 %v294, %v298
      %v303 = vadd.f32 %v295, %v297
      %v304 = vadd.f32 %v296, %v298
      %v305 = vld [vmem:[%s2] sm:$0x7f]
      %v306 = vld [vmem:[%s2 + $0x8] sm:$0x7f]
      %v307 = vld [vmem:[%s2 + $0x10] sm:$0x7f]
      %309 = vset.pattern.permute.xlu0 0
      %310 = vperm.xlu0 %309, %v305
      %v311 = vpop.permute.xlu0 %310
      %314 = vset.pattern.permute.xlu0 0
      %315 = vperm.xlu0 %314, %v306
      %v316 = vpop.permute.xlu0 %315
      %319 = vset.pattern.permute.xlu0 0
      %320 = vperm.xlu0 %319, %v307
      %v321 = vpop.permute.xlu0 %320
      %v323 = vmul.f32 %v299, %v311
      %v324 = vmul.f32 %v300, %v311
      %v325 = vmul.f32 %v301, %v316
      %v326 = vmul.f32 %v302, %v316
      %v327 = vmul.f32 %v303, %v321
      %v328 = vmul.f32 %v304, %v321
      %329 = vst [vmem:[%s230] sm:$0x7f] %v323
      %330 = vst [vmem:[%s230 + $0x8] sm:$0x7f] %v324
      %331 = vst [vmem:[%s230 + $0x10] sm:$0x7f] %v325
      %332 = vst [vmem:[%s230 + $0x18] sm:$0x7f] %v326
      %333 = vst [vmem:[%s230 + $0x20] sm:$0x7f] %v327
      %334 = vst [vmem:[%s230 + $0x28] sm:$0x7f] %v328
      %s335 = smul.u32 2, %s19
      %p336 = scmp.lt.s32.totalorder %s18, 1
      %s337 = scalar_select %p336, %s18, 1
      %p338 = scmp.lt.s32.totalorder %s335, 1
      %s339 = scalar_select %p338, %s335, 1
      %s340 = smul.addr %s337, 6
      %s341 = sadd.s32 %s339, %s340
      %s342 = smul.addr %s341, 8
      %s343 = scalar_lea.vmem %s3, %s342
      // Predicated region
      $region33: #{tpu_custom_call.1} parent=31 // pred_check
        %p344 = pneg %p121
      $region34: #{tpu_custom_call.1} parent=31 // pred_check_branch
        %346 = sbr.rel (%p344) target = $region36
      $region35: #{tpu_custom_call.1} parent=31 // pred_region
        %s347 = smul.u32 2, %s19
      $region36: #{tpu_custom_call.1} parent=31 // pred_fallthru
        _
    $region32: #{tpu_custom_call.1} parent=5 // pred_fallthru
      _
    %p348 = scmp.le.s32.totalorder 2, %s9
    // Predicated region
    $region37: #{tpu_custom_call.1} parent=5 // pred_check
      %p349 = pneg %p348
    $region38: #{tpu_custom_call.1} parent=5 // pred_check_branch
      %351 = sbr.rel (%p349) target = $region40
    $region39: #{tpu_custom_call.1} parent=5 // pred_region
      %s352 = ssub.s32 %s9, 2
      // Predicated region
      $region41: #{tpu_custom_call.1} parent=39 // pred_check
        %p353 = pneg %p127
      $region42: #{tpu_custom_call.1} parent=39 // pred_check_branch
        %355 = sbr.rel (%p353) target = $region44
      $region43: #{tpu_custom_call.1} parent=39 // pred_region
        %s356 = smul.u32 2, %s21
        %p357 = scmp.lt.s32.totalorder %s20, 1
        %s358 = scalar_select %p357, %s20, 1
        %p359 = scmp.lt.s32.totalorder %s356, 1
        %s360 = scalar_select %p359, %s356, 1
        %s361 = smul.addr %s358, 6
        %s362 = sadd.s32 %s360, %s361
        %s363 = smul.addr %s362, 8
        %s364 = scalar_lea.vmem %s3, %s363
      $region44: #{tpu_custom_call.1} parent=39 // pred_fallthru
        _
    $region40: #{tpu_custom_call.1} parent=5 // pred_fallthru
      _
  $region6: #{tpu_custom_call.1} parent=0 // loop_footer
    %s13 = sadd.s32 1, %s9
  $region7: #{tpu_custom_call.1} parent=0 // loop_footer_branch
    %8 = sbr.rel target = $region3
  $region8: #{tpu_custom_call.1} parent=0 // loop_exit
    _

</llo_original>
